<compile_context>
chip_gen: v7x
topology: tpu7x:2x2x1
jax: 0.10.0
libtpu: 0.0.40
codegen_flags: <defaults>
</compile_context>

<pallas_src>
import math

import jax
import jax.numpy as jnp
from jax.experimental import pallas as pl
from jax.experimental.pallas import tpu as pltpu


def _round_up(n: int, m: int) -> int:
    return ((n + m - 1) // m) * m


def _lane_pad(n: int) -> int:
    return _round_up(max(int(n), 1), 128)


def mlp_kernel(x_ref, w1_ref, b1_ref, w2_ref, b2_ref, o_ref):
    """Fused packed MLP tile: out = relu(x @ W1 + b1) @ W2 + b2.

    Weights arrive pre-packed (block-diagonal) and pre-cast to the MXU dtype
    in the wrapper; biases are f32.  Both GEMMs accumulate in f32; only the
    MXU *operands* are in the (possibly bf16) compute dtype.
    """
    x = x_ref[...].astype(w1_ref.dtype)
    h = jnp.dot(x, w1_ref[...], preferred_element_type=jnp.float32)
    h = jnp.maximum(h + b1_ref[...], 0.0)
    out = jnp.dot(h.astype(w2_ref.dtype), w2_ref[...],
                  preferred_element_type=jnp.float32)
    o_ref[...] = (out + b2_ref[...]).astype(o_ref.dtype)


def predictor_head_forward(x, w1, b1, w2, b2, *, block_m=8192,
                           mxu_dtype=jnp.bfloat16):
    """x: (B, inputDim); w1: (inputDim, dim1); b1: (dim1,) or (1, dim1);
       w2: (dim1, nClass); b2: (nClass,) or (1, nClass). Returns (B, nClass)."""
    B, input_dim = x.shape
    dim1 = int(w1.shape[1])
    n_class = int(w2.shape[1])

    b1 = jnp.reshape(b1, (1, dim1)).astype(jnp.float32)
    b2 = jnp.reshape(b2, (1, n_class)).astype(jnp.float32)

    # ---- lane-dense row folding ------------------------------------------
    if n_class < 128 and 128 % n_class == 0:
        fold = 128 // n_class
    else:
        fold = 1  # nClass already lane-friendly (>=128 or not a divisor)

    if fold > 1:
        eye = jnp.eye(fold, dtype=jnp.float32)
        w1p = jnp.kron(eye, w1.astype(jnp.float32))   # (fold*inD, fold*dim1)
        w2p = jnp.kron(eye, w2.astype(jnp.float32))   # (fold*dim1, fold*nC)
        b1p = jnp.tile(b1, (1, fold))
        b2p = jnp.tile(b2, (1, fold))
    else:
        w1p, w2p, b1p, b2p = w1, w2, b1, b2
    w1p = w1p.astype(mxu_dtype)
    w2p = w2p.astype(mxu_dtype)

    in_dim_p = fold * input_dim
    hid_dim_p = fold * dim1
    out_dim_p = fold * n_class

    # ---- batch tile selection --------------------------------------------
    x_item = jnp.dtype(x.dtype).itemsize
    mxu_item = jnp.dtype(mxu_dtype).itemsize
    sublane = {4: 8, 2: 16, 1: 32}.get(x_item, 8)   # packed sublane tile
    granule = fold * sublane                        # eff_block divisibility

    b_ceil = _round_up(B, granule)
    block_m_eff = max(granule, _round_up(block_m, granule))
    n_steps = max(1, pl.cdiv(b_ceil, block_m_eff))
    # Balance tiles across steps so the pad tail never exceeds ~granule/step.
    eff_block = _round_up(pl.cdiv(b_ceil, n_steps), granule)

    # ---- lane-padded VMEM estimate & generation-aware budget --------------
    def vmem_estimate(rows):  # rows = packed rows per grid step
        xin = 2 * rows * _lane_pad(in_dim_p) * x_item            # x dbl-buf
        out = 2 * rows * _lane_pad(out_dim_p) * x_item           # out dbl-buf
        wts = 2 * (_round_up(in_dim_p, 8) * _lane_pad(hid_dim_p) * mxu_item
                   + _round_up(hid_dim_p, 8) * _lane_pad(out_dim_p) * mxu_item
                   + 8 * _lane_pad(hid_dim_p) * 4
                   + 8 * _lane_pad(out_dim_p) * 4)
        tmp = rows * (_lane_pad(in_dim_p) * mxu_item             # x cast
                      + _lane_pad(hid_dim_p) * (4 + mxu_item)    # h f32+bf16
                      + _lane_pad(out_dim_p) * 4)                # out f32
        return xin + out + wts + tmp

    vmem_cap = 64 << 20                  # conservative default (v7x per-TC)
    try:
        vmem_cap = int(getattr(pltpu.get_tpu_info(), "vmem_capacity_bytes",
                               vmem_cap))
    except Exception:
        pass
    vmem_budget = min(int(0.8 * vmem_cap), 112 << 20)  # >64MiB ok on v5e/v6e
    headroom = 6 << 20                                  # compiler scratch
    while (eff_block > granule
           and vmem_estimate(eff_block // fold) + headroom > vmem_budget):
        eff_block = max(granule, _round_up(eff_block // 2, granule))

    b_pad = _round_up(B, eff_block)
    if b_pad != B:
        x = jnp.pad(x, ((0, b_pad - B), (0, 0)))
    tile_rows = eff_block // fold
    grid = (b_pad // eff_block,)

    # Row-major fold of `fold` logical rows into one 128-lane-wide kernel row
    # (bit-identical view; done outside the kernel, so it is free).
    x_packed = x.reshape(b_pad // fold, in_dim_p)

    vmem_limit = int(min(vmem_budget,
                         max(32 << 20, vmem_estimate(tile_rows) + headroom)))

    flops = 2 * b_pad * fold * (input_dim * dim1 + dim1 * n_class)
    bytes_accessed = (b_pad * (input_dim + n_class) * x_item
                      + (w1p.size + w2p.size) * mxu_item
                      + (b1p.size + b2p.size) * 4)

    # TODO(synk): if the x DMA is still exposed at moderate tiles, bump
    # in_specs[0] to pipeline_mode=pl.Buffered(3).
    out_packed = pl.pallas_call(
        mlp_kernel,
        out_shape=jax.ShapeDtypeStruct((b_pad // fold, out_dim_p), x.dtype),
        grid_spec=pl.GridSpec(
            grid=grid,
            in_specs=[
                # Streaming input: one (tile_rows, fold*inputDim) tile / step.
                pl.BlockSpec((tile_rows, in_dim_p), lambda i: (i, 0)),
                # Packed weights / biases: constant index_map -> resident.
                pl.BlockSpec((in_dim_p, hid_dim_p), lambda i: (0, 0)),
                pl.BlockSpec((1, hid_dim_p), lambda i: (0, 0)),
                pl.BlockSpec((hid_dim_p, out_dim_p), lambda i: (0, 0)),
                pl.BlockSpec((1, out_dim_p), lambda i: (0, 0)),
            ],
            out_specs=pl.BlockSpec((tile_rows, out_dim_p), lambda i: (i, 0)),
        ),
        compiler_params=pltpu.CompilerParams(
            dimension_semantics=("parallel",),
            vmem_limit_bytes=vmem_limit,
        ),
        cost_estimate=pl.CostEstimate(
            flops=int(flops), transcendentals=0,
            bytes_accessed=int(bytes_accessed)),
    )(x_packed, w1p, b1p, w2p, b2p)

    out = out_packed.reshape(b_pad, n_class)   # undo the row fold (free view)
    return out[:B] if b_pad != B else out


def init_linear_params(key, in_features, out_features, dtype=jnp.float32):
    # Mimics torch.nn.Linear default init: U(-1/sqrt(fan_in), 1/sqrt(fan_in));
    # stored as (in_features, out_features) so forward is x @ W.
    kw, kb = jax.random.split(key)
    bound = 1.0 / math.sqrt(in_features)
    w = jax.random.uniform(kw, (in_features, out_features), dtype,
                           minval=-bound, maxval=bound)
    b = jax.random.uniform(kb, (1, out_features), dtype,
                           minval=-bound, maxval=bound)
    return w, b


if __name__ == "__main__":
    input_dim, dim1, n_class = 32, 64, 16

    key = jax.random.PRNGKey(0)
    kx1, kx2, k1, k2 = jax.random.split(key, 4)

    w1, b1 = init_linear_params(k1, input_dim, dim1)
    w2, b2 = init_linear_params(k2, dim1, n_class)

    def ref_fn(x):
        h = jnp.maximum(
            jnp.dot(x, w1, precision=jax.lax.Precision.HIGHEST) + b1, 0.0)
        return jnp.dot(h, w2, precision=jax.lax.Precision.HIGHEST) + b2

    # Case 1: small ragged batch (pad + slice path, single grid step),
    # default bf16 MXU operands.
    x1 = jax.random.normal(kx1, (37, input_dim), jnp.float32)
    out1 = jax.block_until_ready(predictor_head_forward(x1, w1, b1, w2, b2))
    assert out1.shape == (37, n_class)
    assert jnp.allclose(out1, ref_fn(x1), atol=5e-2, rtol=5e-2), "bf16 path"

    # Case 2: multi-step grid (small block_m) with a ragged tail, f32 MXU
    # operands (exact torch-f32 Linear semantics).
    x2 = jax.random.normal(kx2, (300, input_dim), jnp.float32)
    out2 = jax.block_until_ready(
        predictor_head_forward(x2, w1, b1, w2, b2, block_m=128,
                               mxu_dtype=jnp.float32))
    assert out2.shape == (300, n_class)
    assert jnp.allclose(out2, ref_fn(x2), atol=1e-2, rtol=1e-2), "f32 path"

    print("KERNEL_OK")
</pallas_src>

<mosaic_0001>
module attributes {stable_mosaic.version = 11 : i64} {
  func.func @mlp_kernel(%arg0: i32, %arg1: memref<8x256xf32, #tpu.memory_space<vmem>>, %arg2: memref<256x512xbf16, #tpu.memory_space<vmem>>, %arg3: memref<1x512xf32, #tpu.memory_space<vmem>>, %arg4: memref<512x128xbf16, #tpu.memory_space<vmem>>, %arg5: memref<1x128xf32, #tpu.memory_space<vmem>>, %arg6: memref<8x128xf32, #tpu.memory_space<vmem>>) attributes {dimension_semantics = [#tpu.dimension_semantics<parallel>], iteration_bounds = array<i64: 1>, scalar_prefetch = 0 : i64, scratch_operands = 0 : i64, tpu.core_type = #tpu.core_type<tc>, window_params = [{transform_indices = @transform_0, window_bounds = array<i64: 8, 256>}, {pipeline_mode = #tpu.pipeline_mode<synchronous>, transform_indices = @transform_1, window_bounds = array<i64: 256, 512>}, {pipeline_mode = #tpu.pipeline_mode<synchronous>, transform_indices = @transform_2, window_bounds = array<i64: 1, 512>}, {pipeline_mode = #tpu.pipeline_mode<synchronous>, transform_indices = @transform_3, window_bounds = array<i64: 512, 128>}, {pipeline_mode = #tpu.pipeline_mode<synchronous>, transform_indices = @transform_4, window_bounds = array<i64: 1, 128>}, {transform_indices = @transform_5, window_bounds = array<i64: 8, 128>}]} {
    %c0 = arith.constant 0 : index
    %c0_0 = arith.constant 0 : index
    %0 = vector.load %arg1[%c0, %c0_0] : memref<8x256xf32, #tpu.memory_space<vmem>>, vector<8x256xf32>
    %1 = arith.truncf %0 : vector<8x256xf32> to vector<8x256xbf16>
    %c0_1 = arith.constant 0 : index
    %c0_2 = arith.constant 0 : index
    %2 = vector.load %arg2[%c0_1, %c0_2] : memref<256x512xbf16, #tpu.memory_space<vmem>>, vector<256x512xbf16>
    %cst = arith.constant dense<0.000000e+00> : vector<8x512xf32>
    %3 = tpu.matmul %1, %2, %cst {dimension_numbers = #tpu.dot_dimension_numbers<[1], [0], [0], [1], [0, 0, 1, 1], [], []>} : vector<8x256xbf16>, vector<256x512xbf16>, vector<8x512xf32> -> vector<8x512xf32>
    %c0_3 = arith.constant 0 : index
    %c0_4 = arith.constant 0 : index
    %4 = vector.load %arg3[%c0_3, %c0_4] : memref<1x512xf32, #tpu.memory_space<vmem>>, vector<1x512xf32>
    %5 = vector.broadcast %4 : vector<1x512xf32> to vector<8x512xf32>
    %6 = arith.addf %3, %5 : vector<8x512xf32>
    %cst_5 = arith.constant 0.000000e+00 : f32
    %7 = vector.broadcast %cst_5 : f32 to vector<8x512xf32>
    %8 = arith.maximumf %6, %7 : vector<8x512xf32>
    %9 = arith.truncf %8 : vector<8x512xf32> to vector<8x512xbf16>
    %c0_6 = arith.constant 0 : index
    %c0_7 = arith.constant 0 : index
    %10 = vector.load %arg4[%c0_6, %c0_7] : memref<512x128xbf16, #tpu.memory_space<vmem>>, vector<512x128xbf16>
    %cst_8 = arith.constant dense<0.000000e+00> : vector<8x128xf32>
    %11 = tpu.matmul %9, %10, %cst_8 {dimension_numbers = #tpu.dot_dimension_numbers<[1], [0], [0], [1], [0, 0, 1, 1], [], []>} : vector<8x512xbf16>, vector<512x128xbf16>, vector<8x128xf32> -> vector<8x128xf32>
    %c0_9 = arith.constant 0 : index
    %c0_10 = arith.constant 0 : index
    %12 = vector.load %arg5[%c0_9, %c0_10] : memref<1x128xf32, #tpu.memory_space<vmem>>, vector<1x128xf32>
    %13 = vector.broadcast %12 : vector<1x128xf32> to vector<8x128xf32>
    %14 = arith.addf %11, %13 : vector<8x128xf32>
    %c0_11 = arith.constant 0 : index
    %c0_12 = arith.constant 0 : index
    %15 = vector.load %arg6[%c0_11, %c0_12] : memref<8x128xf32, #tpu.memory_space<vmem>>, vector<8x128xf32>
    tpu.vector_store %arg6[%c0_11, %c0_12], %14 {strides = array<i32>} : memref<8x128xf32, #tpu.memory_space<vmem>>, vector<8x128xf32>,
    return
  }
  func.func @transform_0(%arg0: i32) -> (i32, i32) {
    %c0_i32 = arith.constant 0 : i32
    %c0_i32_0 = arith.constant 0 : i32
    return %arg0, %c0_i32 : i32, i32
  }
  func.func @transform_1(%arg0: i32) -> (i32, i32) {
    %c0_i32 = arith.constant 0 : i32
    %c0_i32_0 = arith.constant 0 : i32
    %c0_i32_1 = arith.constant 0 : i32
    return %c0_i32, %c0_i32_0 : i32, i32
  }
  func.func @transform_2(%arg0: i32) -> (i32, i32) {
    %c0_i32 = arith.constant 0 : i32
    %c0_i32_0 = arith.constant 0 : i32
    %c0_i32_1 = arith.constant 0 : i32
    return %c0_i32, %c0_i32_0 : i32, i32
  }
  func.func @transform_3(%arg0: i32) -> (i32, i32) {
    %c0_i32 = arith.constant 0 : i32
    %c0_i32_0 = arith.constant 0 : i32
    %c0_i32_1 = arith.constant 0 : i32
    return %c0_i32, %c0_i32_0 : i32, i32
  }
  func.func @transform_4(%arg0: i32) -> (i32, i32) {
    %c0_i32 = arith.constant 0 : i32
    %c0_i32_0 = arith.constant 0 : i32
    %c0_i32_1 = arith.constant 0 : i32
    return %c0_i32, %c0_i32_0 : i32, i32
  }
  func.func @transform_5(%arg0: i32) -> (i32, i32) {
    %c0_i32 = arith.constant 0 : i32
    %c0_i32_0 = arith.constant 0 : i32
    return %arg0, %c0_i32 : i32, i32
  }
}

</mosaic_0001>

<llo_original>
// kernel: tpu_custom_call.1
$region0: #{tpu_custom_call.1}
  #allocation0 [shape = 'u32[]', space=smem, size = 0x4, offset = 0x4, fixed_abs, tag = 'smem constant byte address 0x4 - core index']
  #allocation1 [shape = 'u32[144,128]{1,0:T(1,128)}', space=vmem, size = 0x12000, scoped, tag = 'internal scratch']
  %s0 = inlined_call_operand.hbm [shape: f32[8,256], index: 0, kind: input, shape index: {}]
  %s1 = inlined_call_operand.hbm [shape: bf16[256,512], index: 1, kind: input, shape index: {}]
  %s2 = inlined_call_operand.vmem [shape: f32[1,512], index: 2, kind: input, shape index: {}]
  %s3 = inlined_call_operand.hbm [shape: bf16[512,128], index: 3, kind: input, shape index: {}]
  %s4 = inlined_call_operand.vmem [shape: f32[1,128], index: 4, kind: input, shape index: {}]
  %s5 = inlined_call_operand.hbm [shape: f32[8,128], index: 5, kind: output, shape index: {}]
  %s6 = sld [smem:[#allocation0]]
  $region42: #{tpu_custom_call.1} parent=0
    _
  %s8 = ssub.s32 1, %s6
  %s9 = scalar_select 0, %s8, %s6
  $region1: #{tpu_custom_call.1} parent=0
    #allocation2 [shape = 'u8[8192]{0}', space=vmem, size = 0x2000, scoped, tag = 'input window, operand 0, single buffered']
    #allocation3 [shape = 's32[1]{0}', space=sflag, size = 0x4, scoped, tag = 'scoped memory for tpu_custom_call.1']
    #allocation4 [shape = 's32[1]{0}', space=sflag, size = 0x4, scoped, tag = 'scoped memory for tpu_custom_call.1']
    #allocation5 [shape = 'u8[262144]{0}', space=vmem, size = 0x40000, scoped, tag = 'input window, operand 1, single buffered']
    #allocation6 [shape = 's32[1]{0}', space=sflag, size = 0x4, scoped, tag = 'scoped memory for tpu_custom_call.1']
    #allocation7 [shape = 'u8[131072]{0}', space=vmem, size = 0x20000, scoped, tag = 'input window, operand 3, single buffered']
    #allocation8 [shape = 'u8[4096]{0}', space=vmem, size = 0x1000, scoped, tag = 'output window, operand 0, single buffered']
    %10 = vsyncpa [#allocation3], 0
    %11 = vsyncpa [#allocation6], 0
    %12 = vsyncpa [#allocation4], 0
    // Predicated region
    $region2: #{tpu_custom_call.1} parent=1 // pred_check
      _
    $region3: #{tpu_custom_call.1} parent=1 // pred_check_branch
      %14 = sbr.rel (0) target = $region5
    $region4: #{tpu_custom_call.1} parent=1 // pred_region
      %s16 = ssub.s32 256, 256
      %17 = vsyncadd [#allocation3], %s16
      %s19 = sshll.u32 [#allocation2], 4
      %s20 = int_to_ptr.vmem [resolvable:$true] %s19
      %22 = dma.hbm_to_vmem [thread:$0]  %s0, 256, %s20, [#allocation3]
    $region5: #{tpu_custom_call.1} parent=1 // pred_fallthru
      _
    // Predicated region
    $region6: #{tpu_custom_call.1} parent=1 // pred_check
      _
    $region7: #{tpu_custom_call.1} parent=1 // pred_check_branch
      %24 = sbr.rel (0) target = $region9
    $region8: #{tpu_custom_call.1} parent=1 // pred_region
      %s26 = ssub.s32 8192, 8192
      %27 = vsyncadd [#allocation6], %s26
      %s28 = sshll.u32 [#allocation5], 4
      %s29 = int_to_ptr.vmem [resolvable:$true] %s28
      %34 = dma.hbm_to_vmem [thread:$0]  %s1, 8192, %s29, [#allocation6], 256, 256, 16
    $region9: #{tpu_custom_call.1} parent=1 // pred_fallthru
      _
    // Predicated region
    $region10: #{tpu_custom_call.1} parent=1 // pred_check
      _
    $region11: #{tpu_custom_call.1} parent=1 // pred_check_branch
      %36 = sbr.rel (0) target = $region13
    $region12: #{tpu_custom_call.1} parent=1 // pred_region
      _
    $region13: #{tpu_custom_call.1} parent=1 // pred_fallthru
      _
    // Predicated region
    $region14: #{tpu_custom_call.1} parent=1 // pred_check
      _
    $region15: #{tpu_custom_call.1} parent=1 // pred_check_branch
      %38 = sbr.rel (0) target = $region17
    $region16: #{tpu_custom_call.1} parent=1 // pred_region
      %s40 = ssub.s32 4096, 4096
      %41 = vsyncadd [#allocation6], %s40
      %s42 = sshll.u32 [#allocation7], 4
      %s43 = int_to_ptr.vmem [resolvable:$true] %s42
      %48 = dma.hbm_to_vmem [thread:$0]  %s3, 4096, %s43, [#allocation6], 64, 64, 4
    $region17: #{tpu_custom_call.1} parent=1 // pred_fallthru
      _
    // Predicated region
    $region18: #{tpu_custom_call.1} parent=1 // pred_check
      _
    $region19: #{tpu_custom_call.1} parent=1 // pred_check_branch
      %50 = sbr.rel (0) target = $region21
    $region20: #{tpu_custom_call.1} parent=1 // pred_region
      _
    $region21: #{tpu_custom_call.1} parent=1 // pred_fallthru
      _
    // Predicated region
    $region22: #{tpu_custom_call.1} parent=1 // pred_check
      _
    $region23: #{tpu_custom_call.1} parent=1 // pred_check_branch
      %52 = sbr.rel (0) target = $region25
    $region24: #{tpu_custom_call.1} parent=1 // pred_region
      %53 = dma.done [#allocation3], 256
    $region25: #{tpu_custom_call.1} parent=1 // pred_fallthru
      _
    // Predicated region
    $region26: #{tpu_custom_call.1} parent=1 // pred_check
      _
    $region27: #{tpu_custom_call.1} parent=1 // pred_check_branch
      %55 = sbr.rel (0) target = $region29
    $region28: #{tpu_custom_call.1} parent=1 // pred_region
      %56 = dma.done [#allocation6], 8192
    $region29: #{tpu_custom_call.1} parent=1 // pred_fallthru
      _
    // Predicated region
    $region30: #{tpu_custom_call.1} parent=1 // pred_check
      _
    $region31: #{tpu_custom_call.1} parent=1 // pred_check_branch
      %58 = sbr.rel (0) target = $region33
    $region32: #{tpu_custom_call.1} parent=1 // pred_region
      %59 = dma.done [#allocation6], 4096
    $region33: #{tpu_custom_call.1} parent=1 // pred_fallthru
      _
    %v61 = vld [vmem:[#allocation2] sm:$0xff]
    %v62 = vld [vmem:[#allocation2 + $0x8] sm:$0xff]
    %v63 = vpack.c.bf16 %v61, %v61
    %v64 = vpack.c.bf16 %v62, %v62
    %v65 = vld [vmem:[#allocation5] sm:$0xff]
    %v66 = vld [vmem:[#allocation5 + $0x8] sm:$0xff]
    %v67 = vld [vmem:[#allocation5 + $0x10] sm:$0xff]
    %v68 = vld [vmem:[#allocation5 + $0x18] sm:$0xff]
    %v69 = vld [vmem:[#allocation5 + $0x20] sm:$0xff]
    %v70 = vld [vmem:[#allocation5 + $0x28] sm:$0xff]
    %v71 = vld [vmem:[#allocation5 + $0x30] sm:$0xff]
    %v72 = vld [vmem:[#allocation5 + $0x38] sm:$0xff]
    %v73 = vld [vmem:[#allocation5 + $0x40] sm:$0xff]
    %v74 = vld [vmem:[#allocation5 + $0x48] sm:$0xff]
    %v75 = vld [vmem:[#allocation5 + $0x50] sm:$0xff]
    %v76 = vld [vmem:[#allocation5 + $0x58] sm:$0xff]
    %v77 = vld [vmem:[#allocation5 + $0x60] sm:$0xff]
    %v78 = vld [vmem:[#allocation5 + $0x68] sm:$0xff]
    %v79 = vld [vmem:[#allocation5 + $0x70] sm:$0xff]
    %v80 = vld [vmem:[#allocation5 + $0x78] sm:$0xff]
    %v81 = vld [vmem:[#allocation5 + $0x80] sm:$0xff]
    %v82 = vld [vmem:[#allocation5 + $0x88] sm:$0xff]
    %v83 = vld [vmem:[#allocation5 + $0x90] sm:$0xff]
    %v84 = vld [vmem:[#allocation5 + $0x98] sm:$0xff]
    %v85 = vld [vmem:[#allocation5 + $0xa0] sm:$0xff]
    %v86 = vld [vmem:[#allocation5 + $0xa8] sm:$0xff]
    %v87 = vld [vmem:[#allocation5 + $0xb0] sm:$0xff]
    %v88 = vld [vmem:[#allocation5 + $0xb8] sm:$0xff]
    %v89 = vld [vmem:[#allocation5 + $0xc0] sm:$0xff]
    %v90 = vld [vmem:[#allocation5 + $0xc8] sm:$0xff]
    %v91 = vld [vmem:[#allocation5 + $0xd0] sm:$0xff]
    %v92 = vld [vmem:[#allocation5 + $0xd8] sm:$0xff]
    %v93 = vld [vmem:[#allocation5 + $0xe0] sm:$0xff]
    %v94 = vld [vmem:[#allocation5 + $0xe8] sm:$0xff]
    %v95 = vld [vmem:[#allocation5 + $0xf0] sm:$0xff]
    %v96 = vld [vmem:[#allocation5 + $0xf8] sm:$0xff]
    %v97 = vld [vmem:[#allocation5 + $0x100] sm:$0xff]
    %v98 = vld [vmem:[#allocation5 + $0x108] sm:$0xff]
    %v99 = vld [vmem:[#allocation5 + $0x110] sm:$0xff]
    %v100 = vld [vmem:[#allocation5 + $0x118] sm:$0xff]
    %v101 = vld [vmem:[#allocation5 + $0x120] sm:$0xff]
    %v102 = vld [vmem:[#allocation5 + $0x128] sm:$0xff]
    %v103 = vld [vmem:[#allocation5 + $0x130] sm:$0xff]
    %v104 = vld [vmem:[#allocation5 + $0x138] sm:$0xff]
    %v105 = vld [vmem:[#allocation5 + $0x140] sm:$0xff]
    %v106 = vld [vmem:[#allocation5 + $0x148] sm:$0xff]
    %v107 = vld [vmem:[#allocation5 + $0x150] sm:$0xff]
    %v108 = vld [vmem:[#allocation5 + $0x158] sm:$0xff]
    %v109 = vld [vmem:[#allocation5 + $0x160] sm:$0xff]
    %v110 = vld [vmem:[#allocation5 + $0x168] sm:$0xff]
    %v111 = vld [vmem:[#allocation5 + $0x170] sm:$0xff]
    %v112 = vld [vmem:[#allocation5 + $0x178] sm:$0xff]
    %v113 = vld [vmem:[#allocation5 + $0x180] sm:$0xff]
    %v114 = vld [vmem:[#allocation5 + $0x188] sm:$0xff]
    %v115 = vld [vmem:[#allocation5 + $0x190] sm:$0xff]
    %v116 = vld [vmem:[#allocation5 + $0x198] sm:$0xff]
    %v117 = vld [vmem:[#allocation5 + $0x1a0] sm:$0xff]
    %v118 = vld [vmem:[#allocation5 + $0x1a8] sm:$0xff]
    %v119 = vld [vmem:[#allocation5 + $0x1b0] sm:$0xff]
    %v120 = vld [vmem:[#allocation5 + $0x1b8] sm:$0xff]
    %v121 = vld [vmem:[#allocation5 + $0x1c0] sm:$0xff]
    %v122 = vld [vmem:[#allocation5 + $0x1c8] sm:$0xff]
    %v123 = vld [vmem:[#allocation5 + $0x1d0] sm:$0xff]
    %v124 = vld [vmem:[#allocation5 + $0x1d8] sm:$0xff]
    %v125 = vld [vmem:[#allocation5 + $0x1e0] sm:$0xff]
    %v126 = vld [vmem:[#allocation5 + $0x1e8] sm:$0xff]
    %v127 = vld [vmem:[#allocation5 + $0x1f0] sm:$0xff]
    %v128 = vld [vmem:[#allocation5 + $0x1f8] sm:$0xff]
    %v129 = vld [vmem:[%s2] sm:$0xf]
    %v131 = vlaneseq
    %v132 = vshrl.u32 %v131, 7
    %v133 = vsub.s32 0, %v132
    %v134 = vrot.slane %v129, %v133
    %v135 = vlaneseq
    %v136 = vshrl.u32 %v135, 7
    %v137 = vsub.s32 1, %v136
    %v138 = vrot.slane %v129, %v137
    %v139 = vlaneseq
    %v140 = vshrl.u32 %v139, 7
    %v141 = vsub.s32 2, %v140
    %v142 = vrot.slane %v129, %v141
    %v143 = vlaneseq
    %v144 = vshrl.u32 %v143, 7
    %v145 = vsub.s32 3, %v144
    %v146 = vrot.slane %v129, %v145
    %v215 = vunpack.c.l.b16 %v65
    %v216 = vunpack.c.h.b16 %v65
    %v217 = vunpack.c.l.b16 %v66
    %v218 = vunpack.c.h.b16 %v66
    %v219 = vunpack.c.l.b16 %v67
    %v220 = vunpack.c.h.b16 %v67
    %v221 = vunpack.c.l.b16 %v68
    %v222 = vunpack.c.h.b16 %v68
    %v223 = vunpack.c.l.b16 %v69
    %v224 = vunpack.c.h.b16 %v69
    %v225 = vunpack.c.l.b16 %v70
    %v226 = vunpack.c.h.b16 %v70
    %v227 = vunpack.c.l.b16 %v71
    %v228 = vunpack.c.h.b16 %v71
    %v229 = vunpack.c.l.b16 %v72
    %v230 = vunpack.c.h.b16 %v72
    %v231 = vunpack.c.l.b16 %v73
    %v232 = vunpack.c.h.b16 %v73
    %v233 = vunpack.c.l.b16 %v74
    %v234 = vunpack.c.h.b16 %v74
    %v235 = vunpack.c.l.b16 %v75
    %v236 = vunpack.c.h.b16 %v75
    %v237 = vunpack.c.l.b16 %v76
    %v238 = vunpack.c.h.b16 %v76
    %v239 = vunpack.c.l.b16 %v77
    %v240 = vunpack.c.h.b16 %v77
    %v241 = vunpack.c.l.b16 %v78
    %v242 = vunpack.c.h.b16 %v78
    %v243 = vunpack.c.l.b16 %v79
    %v244 = vunpack.c.h.b16 %v79
    %v245 = vunpack.c.l.b16 %v80
    %v246 = vunpack.c.h.b16 %v80
    %v247 = vunpack.c.l.b16 %v81
    %v248 = vunpack.c.h.b16 %v81
    %v249 = vunpack.c.l.b16 %v82
    %v250 = vunpack.c.h.b16 %v82
    %v251 = vunpack.c.l.b16 %v83
    %v252 = vunpack.c.h.b16 %v83
    %v253 = vunpack.c.l.b16 %v84
    %v254 = vunpack.c.h.b16 %v84
    %v255 = vunpack.c.l.b16 %v85
    %v256 = vunpack.c.h.b16 %v85
    %v257 = vunpack.c.l.b16 %v86
    %v258 = vunpack.c.h.b16 %v86
    %v259 = vunpack.c.l.b16 %v87
    %v260 = vunpack.c.h.b16 %v87
    %v261 = vunpack.c.l.b16 %v88
    %v262 = vunpack.c.h.b16 %v88
    %v263 = vunpack.c.l.b16 %v89
    %v264 = vunpack.c.h.b16 %v89
    %v265 = vunpack.c.l.b16 %v90
    %v266 = vunpack.c.h.b16 %v90
    %v267 = vunpack.c.l.b16 %v91
    %v268 = vunpack.c.h.b16 %v91
    %v269 = vunpack.c.l.b16 %v92
    %v270 = vunpack.c.h.b16 %v92
    %v271 = vunpack.c.l.b16 %v93
    %v272 = vunpack.c.h.b16 %v93
    %v273 = vunpack.c.l.b16 %v94
    %v274 = vunpack.c.h.b16 %v94
    %v275 = vunpack.c.l.b16 %v95
    %v276 = vunpack.c.h.b16 %v95
    %v277 = vunpack.c.l.b16 %v96
    %v278 = vunpack.c.h.b16 %v96
    %v279 = vunpack.c.l.b16 %v97
    %v280 = vunpack.c.h.b16 %v97
    %v281 = vunpack.c.l.b16 %v98
    %v282 = vunpack.c.h.b16 %v98
    %v283 = vunpack.c.l.b16 %v99
    %v284 = vunpack.c.h.b16 %v99
    %v285 = vunpack.c.l.b16 %v100
    %v286 = vunpack.c.h.b16 %v100
    %v287 = vunpack.c.l.b16 %v101
    %v288 = vunpack.c.h.b16 %v101
    %v289 = vunpack.c.l.b16 %v102
    %v290 = vunpack.c.h.b16 %v102
    %v291 = vunpack.c.l.b16 %v103
    %v292 = vunpack.c.h.b16 %v103
    %v293 = vunpack.c.l.b16 %v104
    %v294 = vunpack.c.h.b16 %v104
    %v295 = vunpack.c.l.b16 %v105
    %v296 = vunpack.c.h.b16 %v105
    %v297 = vunpack.c.l.b16 %v106
    %v298 = vunpack.c.h.b16 %v106
    %v299 = vunpack.c.l.b16 %v107
    %v300 = vunpack.c.h.b16 %v107
    %v301 = vunpack.c.l.b16 %v108
    %v302 = vunpack.c.h.b16 %v108
    %v303 = vunpack.c.l.b16 %v109
    %v304 = vunpack.c.h.b16 %v109
    %v305 = vunpack.c.l.b16 %v110
    %v306 = vunpack.c.h.b16 %v110
    %v307 = vunpack.c.l.b16 %v111
    %v308 = vunpack.c.h.b16 %v111
    %v309 = vunpack.c.l.b16 %v112
    %v310 = vunpack.c.h.b16 %v112
    %v311 = vunpack.c.l.b16 %v113
    %v312 = vunpack.c.h.b16 %v113
    %v313 = vunpack.c.l.b16 %v114
    %v314 = vunpack.c.h.b16 %v114
    %v315 = vunpack.c.l.b16 %v115
    %v316 = vunpack.c.h.b16 %v115
    %v317 = vunpack.c.l.b16 %v116
    %v318 = vunpack.c.h.b16 %v116
    %v319 = vunpack.c.l.b16 %v117
    %v320 = vunpack.c.h.b16 %v117
    %v321 = vunpack.c.l.b16 %v118
    %v322 = vunpack.c.h.b16 %v118
    %v323 = vunpack.c.l.b16 %v119
    %v324 = vunpack.c.h.b16 %v119
    %v325 = vunpack.c.l.b16 %v120
    %v326 = vunpack.c.h.b16 %v120
    %v327 = vunpack.c.l.b16 %v121
    %v328 = vunpack.c.h.b16 %v121
    %v329 = vunpack.c.l.b16 %v122
    %v330 = vunpack.c.h.b16 %v122
    %v331 = vunpack.c.l.b16 %v123
    %v332 = vunpack.c.h.b16 %v123
    %v333 = vunpack.c.l.b16 %v124
    %v334 = vunpack.c.h.b16 %v124
    %v335 = vunpack.c.l.b16 %v125
    %v336 = vunpack.c.h.b16 %v125
    %v337 = vunpack.c.l.b16 %v126
    %v338 = vunpack.c.h.b16 %v126
    %v339 = vunpack.c.l.b16 %v127
    %v340 = vunpack.c.h.b16 %v127
    %v341 = vunpack.c.l.b16 %v128
    %v342 = vunpack.c.h.b16 %v128
    %v343 = vpack.c.b16 %v219, %v215
    %v344 = vpack.c.b16 %v220, %v216
    %v345 = vpack.c.b16 %v221, %v217
    %v346 = vpack.c.b16 %v222, %v218
    %v347 = vpack.c.b16 %v227, %v223
    %v348 = vpack.c.b16 %v228, %v224
    %v349 = vpack.c.b16 %v229, %v225
    %v350 = vpack.c.b16 %v230, %v226
    %v351 = vpack.c.b16 %v235, %v231
    %v352 = vpack.c.b16 %v236, %v232
    %v353 = vpack.c.b16 %v237, %v233
    %v354 = vpack.c.b16 %v238, %v234
    %v355 = vpack.c.b16 %v243, %v239
    %v356 = vpack.c.b16 %v244, %v240
    %v357 = vpack.c.b16 %v245, %v241
    %v358 = vpack.c.b16 %v246, %v242
    %v359 = vpack.c.b16 %v251, %v247
    %v360 = vpack.c.b16 %v252, %v248
    %v361 = vpack.c.b16 %v253, %v249
    %v362 = vpack.c.b16 %v254, %v250
    %v363 = vpack.c.b16 %v259, %v255
    %v364 = vpack.c.b16 %v260, %v256
    %v365 = vpack.c.b16 %v261, %v257
    %v366 = vpack.c.b16 %v262, %v258
    %v367 = vpack.c.b16 %v267, %v263
    %v368 = vpack.c.b16 %v268, %v264
    %v369 = vpack.c.b16 %v269, %v265
    %v370 = vpack.c.b16 %v270, %v266
    %v371 = vpack.c.b16 %v275, %v271
    %v372 = vpack.c.b16 %v276, %v272
    %v373 = vpack.c.b16 %v277, %v273
    %v374 = vpack.c.b16 %v278, %v274
    %v375 = vpack.c.b16 %v283, %v279
    %v376 = vpack.c.b16 %v284, %v280
    %v377 = vpack.c.b16 %v285, %v281
    %v378 = vpack.c.b16 %v286, %v282
    %v379 = vpack.c.b16 %v291, %v287
    %v380 = vpack.c.b16 %v292, %v288
    %v381 = vpack.c.b16 %v293, %v289
    %v382 = vpack.c.b16 %v294, %v290
    %v383 = vpack.c.b16 %v299, %v295
    %v384 = vpack.c.b16 %v300, %v296
    %v385 = vpack.c.b16 %v301, %v297
    %v386 = vpack.c.b16 %v302, %v298
    %v387 = vpack.c.b16 %v307, %v303
    %v388 = vpack.c.b16 %v308, %v304
    %v389 = vpack.c.b16 %v309, %v305
    %v390 = vpack.c.b16 %v310, %v306
    %v391 = vpack.c.b16 %v315, %v311
    %v392 = vpack.c.b16 %v316, %v312
    %v393 = vpack.c.b16 %v317, %v313
    %v394 = vpack.c.b16 %v318, %v314
    %v395 = vpack.c.b16 %v323, %v319
    %v396 = vpack.c.b16 %v324, %v320
    %v397 = vpack.c.b16 %v325, %v321
    %v398 = vpack.c.b16 %v326, %v322
    %v399 = vpack.c.b16 %v331, %v327
    %v400 = vpack.c.b16 %v332, %v328
    %v401 = vpack.c.b16 %v333, %v329
    %v402 = vpack.c.b16 %v334, %v330
    %v403 = vpack.c.b16 %v339, %v335
    %v404 = vpack.c.b16 %v340, %v336
    %v405 = vpack.c.b16 %v341, %v337
    %v406 = vpack.c.b16 %v342, %v338
    %471 = vmatprep.subr.bf16.mxu0 %v344
    %472 = vmatpush1.bf16.msra.mxu0 %v343
    %473 = vmatprep.subr.bf16.mxu0 %v348
    %474 = vmatpush1.bf16.msra.mxu0 %v347
    %475 = vmatprep.subr.bf16.mxu0 %v352
    %476 = vmatpush1.bf16.msra.mxu0 %v351
    %477 = vmatprep.subr.bf16.mxu0 %v356
    %478 = vmatpush1.bf16.msra.mxu0 %v355
    %479 = vmatprep.subr.bf16.mxu0 %v360
    %480 = vmatpush1.bf16.msra.mxu0 %v359
    %481 = vmatprep.subr.bf16.mxu0 %v364
    %482 = vmatpush1.bf16.msra.mxu0 %v363
    %483 = vmatprep.subr.bf16.mxu0 %v368
    %484 = vmatpush1.bf16.msra.mxu0 %v367
    %485 = vmatprep.subr.bf16.mxu0 %v372
    %486 = vmatpush1.bf16.msra.mxu0 %v371
    %487 = vmatprep.subr.bf16.mxu0 %v376
    %488 = vmatpush1.bf16.msra.mxu0 %v375
    %489 = vmatprep.subr.bf16.mxu0 %v380
    %490 = vmatpush1.bf16.msra.mxu0 %v379
    %491 = vmatprep.subr.bf16.mxu0 %v384
    %492 = vmatpush1.bf16.msra.mxu0 %v383
    %493 = vmatprep.subr.bf16.mxu0 %v388
    %494 = vmatpush1.bf16.msra.mxu0 %v387
    %495 = vmatprep.subr.bf16.mxu0 %v392
    %496 = vmatpush1.bf16.msra.mxu0 %v391
    %497 = vmatprep.subr.bf16.mxu0 %v396
    %498 = vmatpush1.bf16.msra.mxu0 %v395
    %499 = vmatprep.subr.bf16.mxu0 %v400
    %500 = vmatpush1.bf16.msra.mxu0 %v399
    %501 = vmatprep.subr.bf16.mxu0 %v404
    %502 = vmatpush1.bf16.msra.mxu0 %v403
    %503 = vmatprep.mubr.bf16.mxu0 %v64
    %504 = vmatmul.mubr.bf16.gmra.mrb[0].mxu0 %v63
    %v505 = vpop.f32.mrb[0].mxu0
    %v506 = vadd.f32 %v134, %v505
    %v507 = vpop.f32.mrb[0].mxu0
    %v508 = vadd.f32 %v138, %v507
    %v509 = vpop.f32.mrb[0].mxu0
    %v510 = vpop.f32.mrb[0].mxu0
    %511 = vdwg.mxu0
    %512 = vmatprep.subr.bf16.mxu0 %v346
    %513 = vmatpush1.bf16.msra.mxu0 %v345
    %514 = vmatprep.subr.bf16.mxu0 %v350
    %515 = vmatpush1.bf16.msra.mxu0 %v349
    %516 = vmatprep.subr.bf16.mxu0 %v354
    %517 = vmatpush1.bf16.msra.mxu0 %v353
    %518 = vmatprep.subr.bf16.mxu0 %v358
    %519 = vmatpush1.bf16.msra.mxu0 %v357
    %520 = vmatprep.subr.bf16.mxu0 %v362
    %521 = vmatpush1.bf16.msra.mxu0 %v361
    %522 = vmatprep.subr.bf16.mxu0 %v366
    %523 = vmatpush1.bf16.msra.mxu0 %v365
    %524 = vmatprep.subr.bf16.mxu0 %v370
    %525 = vmatpush1.bf16.msra.mxu0 %v369
    %526 = vmatprep.subr.bf16.mxu0 %v374
    %527 = vmatpush1.bf16.msra.mxu0 %v373
    %528 = vmatprep.subr.bf16.mxu0 %v378
    %529 = vmatpush1.bf16.msra.mxu0 %v377
    %530 = vmatprep.subr.bf16.mxu0 %v382
    %531 = vmatpush1.bf16.msra.mxu0 %v381
    %532 = vmatprep.subr.bf16.mxu0 %v386
    %533 = vmatpush1.bf16.msra.mxu0 %v385
    %534 = vmatprep.subr.bf16.mxu0 %v390
    %535 = vmatpush1.bf16.msra.mxu0 %v389
    %536 = vmatprep.subr.bf16.mxu0 %v394
    %537 = vmatpush1.bf16.msra.mxu0 %v393
    %538 = vmatprep.subr.bf16.mxu0 %v398
    %539 = vmatpush1.bf16.msra.mxu0 %v397
    %540 = vmatprep.subr.bf16.mxu0 %v402
    %541 = vmatpush1.bf16.msra.mxu0 %v401
    %542 = vmatprep.subr.bf16.mxu0 %v406
    %543 = vmatpush1.bf16.msra.mxu0 %v405
    %544 = vmatprep.mubr.bf16.mxu0 %v64
    %545 = vmatmul.mubr.bf16.gmra.mrb[0].mxu0 %v63
    %v546 = vpop.f32.mrb[0].mxu0
    %v547 = vadd.f32 %v142, %v546
    %v548 = vpop.f32.mrb[0].mxu0
    %v549 = vadd.f32 %v146, %v548
    %v550 = vpop.f32.mrb[0].mxu0
    %v551 = vpop.f32.mrb[0].mxu0
    %552 = vdwg.mxu0
    %v553 = vmax.f32 %v506, 0.0
    %v554 = vmax.f32 %v508, 0.0
    %v555 = vmax.f32 %v547, 0.0
    %v556 = vmax.f32 %v549, 0.0
    %v557 = vpack.c.bf16 %v553, %v553
    %v558 = vpack.c.bf16 %v554, %v554
    %v559 = vpack.c.bf16 %v555, %v555
    %v560 = vpack.c.bf16 %v556, %v556
    %v561 = vld [vmem:[#allocation7] sm:$0xf]
    %v562 = vld [vmem:[#allocation7 + $0x4] sm:$0xf]
    %v563 = vld [vmem:[#allocation7 + $0x8] sm:$0xf]
    %v564 = vld [vmem:[#allocation7 + $0xc] sm:$0xf]
    %v565 = vld [vmem:[#allocation7 + $0x10] sm:$0xf]
    %v566 = vld [vmem:[#allocation7 + $0x14] sm:$0xf]
    %v567 = vld [vmem:[#allocation7 + $0x18] sm:$0xf]
    %v568 = vld [vmem:[#allocation7 + $0x1c] sm:$0xf]
    %v569 = vld [vmem:[#allocation7 + $0x20] sm:$0xf]
    %v570 = vld [vmem:[#allocation7 + $0x24] sm:$0xf]
    %v571 = vld [vmem:[#allocation7 + $0x28] sm:$0xf]
    %v572 = vld [vmem:[#allocation7 + $0x2c] sm:$0xf]
    %v573 = vld [vmem:[#allocation7 + $0x30] sm:$0xf]
    %v574 = vld [vmem:[#allocation7 + $0x34] sm:$0xf]
    %v575 = vld [vmem:[#allocation7 + $0x38] sm:$0xf]
    %v576 = vld [vmem:[#allocation7 + $0x3c] sm:$0xf]
    %v577 = vld [vmem:[#allocation7 + $0x40] sm:$0xf]
    %v578 = vld [vmem:[#allocation7 + $0x44] sm:$0xf]
    %v579 = vld [vmem:[#allocation7 + $0x48] sm:$0xf]
    %v580 = vld [vmem:[#allocation7 + $0x4c] sm:$0xf]
    %v581 = vld [vmem:[#allocation7 + $0x50] sm:$0xf]
    %v582 = vld [vmem:[#allocation7 + $0x54] sm:$0xf]
    %v583 = vld [vmem:[#allocation7 + $0x58] sm:$0xf]
    %v584 = vld [vmem:[#allocation7 + $0x5c] sm:$0xf]
    %v585 = vld [vmem:[#allocation7 + $0x60] sm:$0xf]
    %v586 = vld [vmem:[#allocation7 + $0x64] sm:$0xf]
    %v587 = vld [vmem:[#allocation7 + $0x68] sm:$0xf]
    %v588 = vld [vmem:[#allocation7 + $0x6c] sm:$0xf]
    %v589 = vld [vmem:[#allocation7 + $0x70] sm:$0xf]
    %v590 = vld [vmem:[#allocation7 + $0x74] sm:$0xf]
    %v591 = vld [vmem:[#allocation7 + $0x78] sm:$0xf]
    %v592 = vld [vmem:[#allocation7 + $0x7c] sm:$0xf]
    %v593 = vld [vmem:[#allocation7 + $0x80] sm:$0xf]
    %v594 = vld [vmem:[#allocation7 + $0x84] sm:$0xf]
    %v595 = vld [vmem:[#allocation7 + $0x88] sm:$0xf]
    %v596 = vld [vmem:[#allocation7 + $0x8c] sm:$0xf]
    %v597 = vld [vmem:[#allocation7 + $0x90] sm:$0xf]
    %v598 = vld [vmem:[#allocation7 + $0x94] sm:$0xf]
    %v599 = vld [vmem:[#allocation7 + $0x98] sm:$0xf]
    %v600 = vld [vmem:[#allocation7 + $0x9c] sm:$0xf]
    %v601 = vld [vmem:[#allocation7 + $0xa0] sm:$0xf]
    %v602 = vld [vmem:[#allocation7 + $0xa4] sm:$0xf]
    %v603 = vld [vmem:[#allocation7 + $0xa8] sm:$0xf]
    %v604 = vld [vmem:[#allocation7 + $0xac] sm:$0xf]
    %v605 = vld [vmem:[#allocation7 + $0xb0] sm:$0xf]
    %v606 = vld [vmem:[#allocation7 + $0xb4] sm:$0xf]
    %v607 = vld [vmem:[#allocation7 + $0xb8] sm:$0xf]
    %v608 = vld [vmem:[#allocation7 + $0xbc] sm:$0xf]
    %v609 = vld [vmem:[#allocation7 + $0xc0] sm:$0xf]
    %v610 = vld [vmem:[#allocation7 + $0xc4] sm:$0xf]
    %v611 = vld [vmem:[#allocation7 + $0xc8] sm:$0xf]
    %v612 = vld [vmem:[#allocation7 + $0xcc] sm:$0xf]
    %v613 = vld [vmem:[#allocation7 + $0xd0] sm:$0xf]
    %v614 = vld [vmem:[#allocation7 + $0xd4] sm:$0xf]
    %v615 = vld [vmem:[#allocation7 + $0xd8] sm:$0xf]
    %v616 = vld [vmem:[#allocation7 + $0xdc] sm:$0xf]
    %v617 = vld [vmem:[#allocation7 + $0xe0] sm:$0xf]
    %v618 = vld [vmem:[#allocation7 + $0xe4] sm:$0xf]
    %v619 = vld [vmem:[#allocation7 + $0xe8] sm:$0xf]
    %v620 = vld [vmem:[#allocation7 + $0xec] sm:$0xf]
    %v621 = vld [vmem:[#allocation7 + $0xf0] sm:$0xf]
    %v622 = vld [vmem:[#allocation7 + $0xf4] sm:$0xf]
    %v623 = vld [vmem:[#allocation7 + $0xf8] sm:$0xf]
    %v624 = vld [vmem:[#allocation7 + $0xfc] sm:$0xf]
    %v625 = vld [vmem:[%s4] sm:$0x1]
    %v627 = vlaneseq
    %v628 = vshrl.u32 %v627, 7
    %v629 = vsub.s32 0, %v628
    %v630 = vrot.slane %v625, %v629
    %v696 = vunpack.c.l.b16 %v561
    %v697 = vunpack.c.l.b16 %v562
    %v698 = vunpack.c.l.b16 %v563
    %v699 = vunpack.c.l.b16 %v564
    %v700 = vunpack.c.l.b16 %v565
    %v701 = vunpack.c.l.b16 %v566
    %v702 = vunpack.c.l.b16 %v567
    %v703 = vunpack.c.l.b16 %v568
    %v704 = vunpack.c.l.b16 %v569
    %v705 = vunpack.c.l.b16 %v570
    %v706 = vunpack.c.l.b16 %v571
    %v707 = vunpack.c.l.b16 %v572
    %v708 = vunpack.c.l.b16 %v573
    %v709 = vunpack.c.l.b16 %v574
    %v710 = vunpack.c.l.b16 %v575
    %v711 = vunpack.c.l.b16 %v576
    %v712 = vunpack.c.l.b16 %v577
    %v713 = vunpack.c.l.b16 %v578
    %v714 = vunpack.c.l.b16 %v579
    %v715 = vunpack.c.l.b16 %v580
    %v716 = vunpack.c.l.b16 %v581
    %v717 = vunpack.c.l.b16 %v582
    %v718 = vunpack.c.l.b16 %v583
    %v719 = vunpack.c.l.b16 %v584
    %v720 = vunpack.c.l.b16 %v585
    %v721 = vunpack.c.l.b16 %v586
    %v722 = vunpack.c.l.b16 %v587
    %v723 = vunpack.c.l.b16 %v588
    %v724 = vunpack.c.l.b16 %v589
    %v725 = vunpack.c.l.b16 %v590
    %v726 = vunpack.c.l.b16 %v591
    %v727 = vunpack.c.l.b16 %v592
    %v728 = vunpack.c.l.b16 %v593
    %v729 = vunpack.c.l.b16 %v594
    %v730 = vunpack.c.l.b16 %v595
    %v731 = vunpack.c.l.b16 %v596
    %v732 = vunpack.c.l.b16 %v597
    %v733 = vunpack.c.l.b16 %v598
    %v734 = vunpack.c.l.b16 %v599
    %v735 = vunpack.c.l.b16 %v600
    %v736 = vunpack.c.l.b16 %v601
    %v737 = vunpack.c.l.b16 %v602
    %v738 = vunpack.c.l.b16 %v603
    %v739 = vunpack.c.l.b16 %v604
    %v740 = vunpack.c.l.b16 %v605
    %v741 = vunpack.c.l.b16 %v606
    %v742 = vunpack.c.l.b16 %v607
    %v743 = vunpack.c.l.b16 %v608
    %v744 = vunpack.c.l.b16 %v609
    %v745 = vunpack.c.l.b16 %v610
    %v746 = vunpack.c.l.b16 %v611
    %v747 = vunpack.c.l.b16 %v612
    %v748 = vunpack.c.l.b16 %v613
    %v749 = vunpack.c.l.b16 %v614
    %v750 = vunpack.c.l.b16 %v615
    %v751 = vunpack.c.l.b16 %v616
    %v752 = vunpack.c.l.b16 %v617
    %v753 = vunpack.c.l.b16 %v618
    %v754 = vunpack.c.l.b16 %v619
    %v755 = vunpack.c.l.b16 %v620
    %v756 = vunpack.c.l.b16 %v621
    %v757 = vunpack.c.l.b16 %v622
    %v758 = vunpack.c.l.b16 %v623
    %v759 = vunpack.c.l.b16 %v624
    %v760 = vpack.c.b16 %v697, %v696
    %v761 = vpack.c.b16 %v699, %v698
    %v762 = vpack.c.b16 %v701, %v700
    %v763 = vpack.c.b16 %v703, %v702
    %v764 = vpack.c.b16 %v705, %v704
    %v765 = vpack.c.b16 %v707, %v706
    %v766 = vpack.c.b16 %v709, %v708
    %v767 = vpack.c.b16 %v711, %v710
    %v768 = vpack.c.b16 %v713, %v712
    %v769 = vpack.c.b16 %v715, %v714
    %v770 = vpack.c.b16 %v717, %v716
    %v771 = vpack.c.b16 %v719, %v718
    %v772 = vpack.c.b16 %v721, %v720
    %v773 = vpack.c.b16 %v723, %v722
    %v774 = vpack.c.b16 %v725, %v724
    %v775 = vpack.c.b16 %v727, %v726
    %v776 = vpack.c.b16 %v729, %v728
    %v777 = vpack.c.b16 %v731, %v730
    %v778 = vpack.c.b16 %v733, %v732
    %v779 = vpack.c.b16 %v735, %v734
    %v780 = vpack.c.b16 %v737, %v736
    %v781 = vpack.c.b16 %v739, %v738
    %v782 = vpack.c.b16 %v741, %v740
    %v783 = vpack.c.b16 %v743, %v742
    %v784 = vpack.c.b16 %v745, %v744
    %v785 = vpack.c.b16 %v747, %v746
    %v786 = vpack.c.b16 %v749, %v748
    %v787 = vpack.c.b16 %v751, %v750
    %v788 = vpack.c.b16 %v753, %v752
    %v789 = vpack.c.b16 %v755, %v754
    %v790 = vpack.c.b16 %v757, %v756
    %v791 = vpack.c.b16 %v759, %v758
    %824 = vmatprep.subr.bf16.mxu0 0
    %825 = vmatpush1.bf16.msra.mxu0 %v760
    %826 = vmatprep.subr.bf16.mxu0 0
    %827 = vmatpush1.bf16.msra.mxu0 %v761
    %828 = vmatprep.subr.bf16.mxu0 0
    %829 = vmatpush1.bf16.msra.mxu0 %v762
    %830 = vmatprep.subr.bf16.mxu0 0
    %831 = vmatpush1.bf16.msra.mxu0 %v763
    %832 = vmatprep.subr.bf16.mxu0 0
    %833 = vmatpush1.bf16.msra.mxu0 %v764
    %834 = vmatprep.subr.bf16.mxu0 0
    %835 = vmatpush1.bf16.msra.mxu0 %v765
    %836 = vmatprep.subr.bf16.mxu0 0
    %837 = vmatpush1.bf16.msra.mxu0 %v766
    %838 = vmatprep.subr.bf16.mxu0 0
    %839 = vmatpush1.bf16.msra.mxu0 %v767
    %840 = vmatprep.subr.bf16.mxu0 0
    %841 = vmatpush1.bf16.msra.mxu0 %v768
    %842 = vmatprep.subr.bf16.mxu0 0
    %843 = vmatpush1.bf16.msra.mxu0 %v769
    %844 = vmatprep.subr.bf16.mxu0 0
    %845 = vmatpush1.bf16.msra.mxu0 %v770
    %846 = vmatprep.subr.bf16.mxu0 0
    %847 = vmatpush1.bf16.msra.mxu0 %v771
    %848 = vmatprep.subr.bf16.mxu0 0
    %849 = vmatpush1.bf16.msra.mxu0 %v772
    %850 = vmatprep.subr.bf16.mxu0 0
    %851 = vmatpush1.bf16.msra.mxu0 %v773
    %852 = vmatprep.subr.bf16.mxu0 0
    %853 = vmatpush1.bf16.msra.mxu0 %v774
    %854 = vmatprep.subr.bf16.mxu0 0
    %855 = vmatpush1.bf16.msra.mxu0 %v775
    %856 = vmatprep.mubr.bf16.mxu0 %v558
    %857 = vmatmul.mubr.bf16.gmra.mrb[0].mxu0 %v557
    %v858 = vpop.f32.mrb[0].mxu0
    %v859 = vadd.f32 %v630, %v858
    %v860 = vpop.f32.mrb[0].mxu0
    %v861 = vpop.f32.mrb[0].mxu0
    %v862 = vpop.f32.mrb[0].mxu0
    %863 = vdwg.mxu0
    %864 = vmatprep.subr.bf16.mxu0 0
    %865 = vmatpush1.bf16.msra.mxu0 %v776
    %866 = vmatprep.subr.bf16.mxu0 0
    %867 = vmatpush1.bf16.msra.mxu0 %v777
    %868 = vmatprep.subr.bf16.mxu0 0
    %869 = vmatpush1.bf16.msra.mxu0 %v778
    %870 = vmatprep.subr.bf16.mxu0 0
    %871 = vmatpush1.bf16.msra.mxu0 %v779
    %872 = vmatprep.subr.bf16.mxu0 0
    %873 = vmatpush1.bf16.msra.mxu0 %v780
    %874 = vmatprep.subr.bf16.mxu0 0
    %875 = vmatpush1.bf16.msra.mxu0 %v781
    %876 = vmatprep.subr.bf16.mxu0 0
    %877 = vmatpush1.bf16.msra.mxu0 %v782
    %878 = vmatprep.subr.bf16.mxu0 0
    %879 = vmatpush1.bf16.msra.mxu0 %v783
    %880 = vmatprep.subr.bf16.mxu0 0
    %881 = vmatpush1.bf16.msra.mxu0 %v784
    %882 = vmatprep.subr.bf16.mxu0 0
    %883 = vmatpush1.bf16.msra.mxu0 %v785
    %884 = vmatprep.subr.bf16.mxu0 0
    %885 = vmatpush1.bf16.msra.mxu0 %v786
    %886 = vmatprep.subr.bf16.mxu0 0
    %887 = vmatpush1.bf16.msra.mxu0 %v787
    %888 = vmatprep.subr.bf16.mxu0 0
    %889 = vmatpush1.bf16.msra.mxu0 %v788
    %890 = vmatprep.subr.bf16.mxu0 0
    %891 = vmatpush1.bf16.msra.mxu0 %v789
    %892 = vmatprep.subr.bf16.mxu0 0
    %893 = vmatpush1.bf16.msra.mxu0 %v790
    %894 = vmatprep.subr.bf16.mxu0 0
    %895 = vmatpush1.bf16.msra.mxu0 %v791
    %896 = vmatprep.mubr.bf16.mxu0 %v560
    %897 = vmatmul.mubr.bf16.gmra.mrb[0].mxu0 %v559
    %v898 = vpop.f32.mrb[0].mxu0
    %v899 = vadd.f32 %v859, %v898
    %v900 = vpop.f32.mrb[0].mxu0
    %v901 = vpop.f32.mrb[0].mxu0
    %v902 = vpop.f32.mrb[0].mxu0
    %903 = vdwg.mxu0
    %904 = vst [vmem:[#allocation8] sm:$0xff] %v899
    // Predicated region
    $region34: #{tpu_custom_call.1} parent=1 // pred_check
      _
    $region35: #{tpu_custom_call.1} parent=1 // pred_check_branch
      %906 = sbr.rel (0) target = $region37
    $region36: #{tpu_custom_call.1} parent=1 // pred_region
      %s908 = ssub.s32 128, 128
      %909 = vsyncadd [#allocation4], %s908
      %s911 = sshll.u32 [#allocation8], 4
      %s912 = int_to_ptr.vmem [resolvable:$true] %s911
      %914 = dma.vmem_to_hbm [thread:$0]  %s912, 128, %s5, [#allocation4]
    $region37: #{tpu_custom_call.1} parent=1 // pred_fallthru
      _
    // Predicated region
    $region38: #{tpu_custom_call.1} parent=1 // pred_check
      _
    $region39: #{tpu_custom_call.1} parent=1 // pred_check_branch
      %916 = sbr.rel (0) target = $region41
    $region40: #{tpu_custom_call.1} parent=1 // pred_region
      %917 = dma.done [#allocation4], 128
    $region41: #{tpu_custom_call.1} parent=1 // pred_fallthru
      _
    %918 = vsyncpa [#allocation3], 1
    %919 = vsyncpa [#allocation6], 1
    %920 = vsyncpa [#allocation4], 1

</llo_original>
